<compile_context>
chip_gen: v7x
topology: tpu7x:2x2x1
jax: 0.10.0
libtpu: 0.0.40
codegen_flags: <defaults>
</compile_context>

<pallas_src>
import functools
import math

import jax
import jax.numpy as jnp
from jax import lax
from jax.experimental import pallas as pl
from jax.experimental.pallas import tpu as pltpu

_INV_SQRT2 = 1.0 / math.sqrt(2.0)
_TANH_C0 = math.sqrt(2.0 / math.pi)
_TANH_C1 = 0.044715


def _round_up(n: int, m: int) -> int:
    return ((n + m - 1) // m) * m


def _cdiv(a: int, b: int) -> int:
    return (a + b - 1) // b


def _gelu(h, approx: bool):
    if approx:
        # tanh lowers to the EUP (a free bundle slot when MXU-bound on v6e/v7x);
        # numerics differ slightly from torch.nn.GELU()'s default erf.
        return 0.5 * h * (1.0 + jnp.tanh(_TANH_C0 * (h + _TANH_C1 * h * h * h)))
    # Exact erf GELU == torch.nn.GELU() default numerics.
    return 0.5 * h * (1.0 + lax.erf(h * _INV_SQRT2))


def _mlp_kernel(x_ref, w1_ref, b1_ref, w2_ref, b2_ref, o_ref, acc_ref, *,
                hid_tile, inner_chunks, approx_gelu):
    # x_ref:  (tm, in_p)            w1_ref: (in_p, hid_block)
    # b1_ref: (1, hid_block) f32    w2_ref: (hid_block, out_p)
    # b2_ref: (1, out_p) f32        o_ref:  (tm, out_p)
    # acc_ref: (tm, out_p) f32 scratch, persists across the hid grid axis.
    k = pl.program_id(1)

    @pl.when(k == 0)
    def _():
        acc_ref[...] = jnp.zeros_like(acc_ref)

    x = x_ref[...]

    def chunk(c, carry):
        start = c * hid_tile
        if not isinstance(start, int):
            start = pl.multiple_of(start, hid_tile)
        s = pl.ds(start, hid_tile)
        # fc1 chunk: native-dtype operands on the MXU, f32 accumulation.
        h = jnp.dot(x, w1_ref[:, s], preferred_element_type=jnp.float32)
        h = h + b1_ref[:, s]
        h = _gelu(h, approx_gelu)
        # fc2 partial product accumulated in f32 VMEM scratch; cast activation
        # back to the weight dtype so bf16 models run fc2 at bf16 MXU rate.
        acc_ref[...] += jnp.dot(h.astype(w2_ref.dtype), w2_ref[s, :],
                                preferred_element_type=jnp.float32)
        return carry

    if inner_chunks == 1:
        chunk(0, 0)
    else:
        lax.fori_loop(0, inner_chunks, chunk, 0, unroll=inner_chunks <= 8)

    # dropout(p=0.0) is the identity -> nothing to do.
    @pl.when(k == pl.num_programs(1) - 1)
    def _():
        o_ref[...] = (acc_ref[...] + b2_ref[...]).astype(o_ref.dtype)


def mlp_pallas(x, w1, b1, w2, b2, *, tm: int = 512, hid_tile: int = 512,
               approx_gelu: bool = False, weight_stream=None):
    """x: (..., in). w1: (in, hid), b1: (hid,), w2: (hid, out), b2: (out,)."""
    in_f = x.shape[-1]
    hid = w1.shape[1]
    out_f = w2.shape[1]
    assert w1.shape[0] == in_f and w2.shape[0] == hid
    assert b1.shape == (hid,) and b2.shape == (out_f,)
    lead_shape = x.shape[:-1]
    M = math.prod(lead_shape) if lead_shape else 1

    xb = x.dtype.itemsize
    wb = w1.dtype.itemsize

    # --- lane-dense feature padding (contraction dims MUST be zero-padded;
    #     GELU(0)=0 so padded hid columns contribute nothing to fc2). ---
    in_p = _round_up(in_f, 128)
    out_p = _round_up(out_f, 128)
    hid_128 = _round_up(hid, 128)
    n_chunks = max(1, _cdiv(hid_128, hid_tile))
    hid_tile_eff = _round_up(_cdiv(hid_128, n_chunks), 128)
    hid_p = hid_tile_eff * n_chunks          # waste <= 127 elems per chunk

    # --- row tile: dtype-correct sublane multiple (8 f32 / 16 bf16 / 32 int8),
    #     and split a single-block grid so both v7x TensorCores get work. ---
    sub = max(8, 32 // xb)
    tm_eff = max(sub, min(_round_up(tm, sub), _round_up(M, sub)))
    if _cdiv(M, tm_eff) == 1 and M > sub:
        tm_eff = _round_up(_cdiv(M, 2), sub)
    grid_m = _cdiv(M, tm_eff)

    # --- VMEM budget: generation-aware (v5e/v6e 128 MiB, v7x 64 MiB). ---
    try:
        vmem_cap = int(pltpu.get_tpu_info().vmem_capacity_bytes)
    except Exception:  # not on a TPU backend / API unavailable
        vmem_cap = 64 << 20
    vmem_budget = int(vmem_cap * 0.85)

    def footprint(hid_block, w_bufs):
        return (
            2 * tm_eff * in_p * xb                       # x tile (dbl buffered)
            + 2 * tm_eff * out_p * xb                    # out tile (dbl buffered)
            + w_bufs * (in_p + out_p) * hid_block * wb   # w1 / w2 blocks
            + w_bufs * 4 * hid_block + 4 * out_p         # f32 biases
            + 4 * tm_eff * out_p                         # f32 accumulator scratch
            + tm_eff * hid_tile_eff * (4 + wb)           # f32 h chunk + cast copy
            + (2 << 20)                                  # slack
        )

    # Resident single-buffered weights when they fit comfortably (<~1/2 VMEM);
    # otherwise stream hid blocks along a reduction grid axis (DMA overlaps
    # compute instead of one big blocking prologue).
    if weight_stream is None:
        weight_stream = footprint(hid_p, 1) > vmem_budget // 2
    if weight_stream:
        n_outer, inner_chunks, w_bufs = n_chunks, 1, 2
        hid_block = hid_tile_eff
    else:
        n_outer, inner_chunks, w_bufs = 1, n_chunks, 1
        hid_block = hid_p

    vmem_limit = int(min(max(int(footprint(hid_block, w_bufs) * 1.5), 16 << 20),
                         vmem_budget))

    # --- operands: rows stay ragged (no full pad/copy of x along M). ---
    x2d = x.reshape(M, in_f)
    if in_p != in_f:
        x2d = jnp.pad(x2d, ((0, 0), (0, in_p - in_f)))
    w1p = jnp.pad(w1, ((0, in_p - in_f), (0, hid_p - hid)))
    w2p = jnp.pad(w2, ((0, hid_p - hid), (0, out_p - out_f)))
    # Biases kept in f32: they are added to the f32 accumulator.
    b1p = jnp.pad(b1.astype(jnp.float32), (0, hid_p - hid)).reshape(1, hid_p)
    b2p = jnp.pad(b2.astype(jnp.float32), (0, out_p - out_f)).reshape(1, out_p)

    grid = (grid_m, n_outer)

    # Constant-index (resident) blocks are single-buffered to halve VMEM;
    # streamed blocks keep default double buffering so DMA overlaps compute.
    res_spec = functools.partial(pl.BlockSpec, pipeline_mode=pl.Buffered(1))
    if weight_stream:
        w1_spec = pl.BlockSpec((in_p, hid_block), lambda i, k: (0, k))
        b1_spec = pl.BlockSpec((1, hid_block), lambda i, k: (0, k))
        w2_spec = pl.BlockSpec((hid_block, out_p), lambda i, k: (k, 0))
    else:
        w1_spec = res_spec((in_p, hid_block), lambda i, k: (0, 0))
        b1_spec = res_spec((1, hid_block), lambda i, k: (0, 0))
        w2_spec = res_spec((hid_block, out_p), lambda i, k: (0, 0))
    b2_spec = res_spec((1, out_p), lambda i, k: (0, 0))

    cost = pl.CostEstimate(
        flops=2 * M * (in_f * hid + hid * out_f),
        transcendentals=M * hid,
        bytes_accessed=int(x.size * xb + (w1.size + w2.size) * wb
                           + (b1.size + b2.size) * b1.dtype.itemsize
                           + M * out_f * xb),
    )

    kernel = functools.partial(_mlp_kernel, hid_tile=hid_tile_eff,
                               inner_chunks=inner_chunks,
                               approx_gelu=approx_gelu)

    out2d = pl.pallas_call(
        kernel,
        out_shape=jax.ShapeDtypeStruct((M, out_p), x.dtype),
        grid_spec=pltpu.PrefetchScalarGridSpec(
            num_scalar_prefetch=0,
            grid=grid,
            in_specs=[
                pl.BlockSpec((tm_eff, in_p), lambda i, k: (i, 0)),  # x rows
                w1_spec, b1_spec, w2_spec, b2_spec,
            ],
            out_specs=pl.BlockSpec((tm_eff, out_p), lambda i, k: (i, 0)),
            scratch_shapes=[pltpu.VMEM((tm_eff, out_p), jnp.float32)],
        ),
        compiler_params=pltpu.CompilerParams(
            dimension_semantics=("parallel", "arbitrary"),
            vmem_limit_bytes=vmem_limit,
        ),
        cost_estimate=cost,
    )(x2d, w1p, b1p, w2p, b2p)

    if out_p != out_f:
        out2d = out2d[:, :out_f]
    return out2d.reshape(*lead_shape, out_f)


def init_mlp_params(key, in_features, hidden_features, out_features,
                    dtype=jnp.float32):
    """Deterministic init mimicking nn.Linear (uniform +/- 1/sqrt(fan_in))."""
    k1, k2, k3, k4 = jax.random.split(key, 4)
    bound1 = 1.0 / math.sqrt(in_features)
    bound2 = 1.0 / math.sqrt(hidden_features)
    # stored already transposed: (in, hid) and (hid, out) so kernel does x @ W
    w1 = jax.random.uniform(k1, (in_features, hidden_features),
                            dtype, -bound1, bound1)
    b1 = jax.random.uniform(k2, (hidden_features,), dtype, -bound1, bound1)
    w2 = jax.random.uniform(k3, (hidden_features, out_features),
                            dtype, -bound2, bound2)
    b2 = jax.random.uniform(k4, (out_features,), dtype, -bound2, bound2)
    return w1, b1, w2, b2


def _ref_mlp(x, w1, b1, w2, b2, approx_gelu=False):
    h = x @ w1 + b1
    h = _gelu(h, approx_gelu)
    return h @ w2 + b2


if __name__ == "__main__":
    key = jax.random.PRNGKey(0)
    k1, k2, k3, k4, k5, k6 = jax.random.split(key, 6)

    # --- test 1: tiny ViT-like tensor (sub-128 feature padding, resident) ---
    B, N, C, H = 2, 8, 32, 64
    x = jax.random.normal(k1, (B, N, C), dtype=jnp.float32)
    w1, b1, w2, b2 = init_mlp_params(k2, C, H, C)
    y = jax.block_until_ready(mlp_pallas(x, w1, b1, w2, b2))
    assert y.shape == (B, N, C)
    assert jnp.allclose(y, _ref_mlp(x, w1, b1, w2, b2), atol=1e-5, rtol=1e-5)

    # --- test 2: odd token count (197): ragged final row block, grid_m >= 2 ---
    B2, N2, C2, H2 = 2, 197, 192, 384
    x2 = jax.random.normal(k3, (B2, N2, C2), dtype=jnp.float32)
    w1b, b1b, w2b, b2b = init_mlp_params(k4, C2, H2, C2)
    y2 = jax.block_until_ready(mlp_pallas(x2, w1b, b1b, w2b, b2b))
    assert y2.shape == (B2, N2, C2)
    assert jnp.allclose(y2, _ref_mlp(x2, w1b, b1b, w2b, b2b),
                        atol=1e-4, rtol=1e-4)

    # --- test 3: streamed-weight path + tanh-approx GELU (multi-step hid
    #     reduction with pl.when-gated accumulator init/finalize) ---
    B3, N3, C3, H3 = 4, 64, 256, 1024
    x3 = jax.random.normal(k5, (B3, N3, C3), dtype=jnp.float32)
    w1c, b1c, w2c, b2c = init_mlp_params(k6, C3, H3, C3)
    y3 = jax.block_until_ready(
        mlp_pallas(x3, w1c, b1c, w2c, b2c, hid_tile=256,
                   approx_gelu=True, weight_stream=True))
    assert y3.shape == (B3, N3, C3)
    assert jnp.allclose(y3, _ref_mlp(x3, w1c, b1c, w2c, b2c, approx_gelu=True),
                        atol=1e-4, rtol=1e-4)

    print("KERNEL_OK")
</pallas_src>

<mosaic_0001>
module attributes {stable_mosaic.version = 11 : i64} {
  func.func @_mlp_kernel(%arg0: i32, %arg1: i32, %arg2: memref<8x128xf32, #tpu.memory_space<vmem>>, %arg3: memref<128x128xf32, #tpu.memory_space<vmem>>, %arg4: memref<1x128xf32, #tpu.memory_space<vmem>>, %arg5: memref<128x128xf32, #tpu.memory_space<vmem>>, %arg6: memref<1x128xf32, #tpu.memory_space<vmem>>, %arg7: memref<8x128xf32, #tpu.memory_space<vmem>>, %arg8: memref<8x128xf32, #tpu.memory_space<vmem>>) attributes {dimension_semantics = [#tpu.dimension_semantics<parallel>, #tpu.dimension_semantics<arbitrary>], iteration_bounds = array<i64: 2, 1>, scalar_prefetch = 0 : i64, scratch_operands = 1 : i64, tpu.core_type = #tpu.core_type<tc>, window_params = [{transform_indices = @transform_0, window_bounds = array<i64: 8, 128>}, {pipeline_mode = #tpu.pipeline_mode<synchronous>, transform_indices = @transform_1, window_bounds = array<i64: 128, 128>}, {pipeline_mode = #tpu.pipeline_mode<synchronous>, transform_indices = @transform_2, window_bounds = array<i64: 1, 128>}, {pipeline_mode = #tpu.pipeline_mode<synchronous>, transform_indices = @transform_3, window_bounds = array<i64: 128, 128>}, {pipeline_mode = #tpu.pipeline_mode<synchronous>, transform_indices = @transform_4, window_bounds = array<i64: 1, 128>}, {transform_indices = @transform_5, window_bounds = array<i64: 8, 128>}]} {
    %c0_i32 = arith.constant 0 : i32
    %0 = arith.cmpi eq, %arg1, %c0_i32 : i32
    %1 = arith.extui %0 : i1 to i32
    %c0_i32_0 = arith.constant 0 : i32
    %2 = arith.cmpi ne, %1, %c0_i32_0 : i32
    scf.if %2 {
      %cst_18 = arith.constant 0.000000e+00 : f32
      %25 = vector.broadcast %cst_18 : f32 to vector<8x128xf32>
      %c0_19 = arith.constant 0 : index
      %c0_20 = arith.constant 0 : index
      %26 = vector.load %arg8[%c0_19, %c0_20] : memref<8x128xf32, #tpu.memory_space<vmem>>, vector<8x128xf32>
      tpu.vector_store %arg8[%c0_19, %c0_20], %25 {strides = array<i32>} : memref<8x128xf32, #tpu.memory_space<vmem>>, vector<8x128xf32>,
    } else {
    }
    %c0 = arith.constant 0 : index
    %c0_1 = arith.constant 0 : index
    %3 = vector.load %arg2[%c0, %c0_1] : memref<8x128xf32, #tpu.memory_space<vmem>>, vector<8x128xf32>
    %c0_2 = arith.constant 0 : index
    %c0_3 = arith.constant 0 : index
    %4 = vector.load %arg3[%c0_2, %c0_3] : memref<128x128xf32, #tpu.memory_space<vmem>>, vector<128x128xf32>
    %cst = arith.constant dense<0.000000e+00> : vector<8x128xf32>
    %5 = tpu.matmul %3, %4, %cst {dimension_numbers = #tpu.dot_dimension_numbers<[1], [0], [0], [1], [0, 0, 1, 1], [], []>} : vector<8x128xf32>, vector<128x128xf32>, vector<8x128xf32> -> vector<8x128xf32>
    %c0_4 = arith.constant 0 : index
    %c0_5 = arith.constant 0 : index
    %6 = vector.load %arg4[%c0_4, %c0_5] : memref<1x128xf32, #tpu.memory_space<vmem>>, vector<1x128xf32>
    %7 = vector.broadcast %6 : vector<1x128xf32> to vector<8x128xf32>
    %8 = arith.addf %5, %7 : vector<8x128xf32>
    %cst_6 = arith.constant 5.000000e-01 : f32
    %9 = vector.broadcast %cst_6 : f32 to vector<8x128xf32>
    %10 = arith.mulf %9, %8 : vector<8x128xf32>
    %cst_7 = arith.constant 0.707106769 : f32
    %11 = vector.broadcast %cst_7 : f32 to vector<8x128xf32>
    %12 = arith.mulf %8, %11 : vector<8x128xf32>
    %13 = math.erf %12 : vector<8x128xf32>
    %cst_8 = arith.constant 1.000000e+00 : f32
    %14 = vector.broadcast %cst_8 : f32 to vector<8x128xf32>
    %15 = arith.addf %14, %13 : vector<8x128xf32>
    %16 = arith.mulf %10, %15 : vector<8x128xf32>
    %c0_9 = arith.constant 0 : index
    %c0_10 = arith.constant 0 : index
    %17 = vector.load %arg8[%c0_9, %c0_10] : memref<8x128xf32, #tpu.memory_space<vmem>>, vector<8x128xf32>
    %c0_11 = arith.constant 0 : index
    %c0_12 = arith.constant 0 : index
    %18 = vector.load %arg5[%c0_11, %c0_12] : memref<128x128xf32, #tpu.memory_space<vmem>>, vector<128x128xf32>
    %cst_13 = arith.constant dense<0.000000e+00> : vector<8x128xf32>
    %19 = tpu.matmul %16, %18, %cst_13 {dimension_numbers = #tpu.dot_dimension_numbers<[1], [0], [0], [1], [0, 0, 1, 1], [], []>} : vector<8x128xf32>, vector<128x128xf32>, vector<8x128xf32> -> vector<8x128xf32>
    %20 = arith.addf %17, %19 : vector<8x128xf32>
    %c0_14 = arith.constant 0 : index
    %c0_15 = arith.constant 0 : index
    %21 = vector.load %arg8[%c0_14, %c0_15] : memref<8x128xf32, #tpu.memory_space<vmem>>, vector<8x128xf32>
    tpu.vector_store %arg8[%c0_14, %c0_15], %20 {strides = array<i32>} : memref<8x128xf32, #tpu.memory_space<vmem>>, vector<8x128xf32>,
    %c0_i32_16 = arith.constant 0 : i32
    %22 = arith.cmpi eq, %arg1, %c0_i32_16 : i32
    %23 = arith.extui %22 : i1 to i32
    %c0_i32_17 = arith.constant 0 : i32
    %24 = arith.cmpi ne, %23, %c0_i32_17 : i32
    scf.if %24 {
      %c0_18 = arith.constant 0 : index
      %c0_19 = arith.constant 0 : index
      %25 = vector.load %arg8[%c0_18, %c0_19] : memref<8x128xf32, #tpu.memory_space<vmem>>, vector<8x128xf32>
      %c0_20 = arith.constant 0 : index
      %c0_21 = arith.constant 0 : index
      %26 = vector.load %arg6[%c0_20, %c0_21] : memref<1x128xf32, #tpu.memory_space<vmem>>, vector<1x128xf32>
      %27 = vector.broadcast %26 : vector<1x128xf32> to vector<8x128xf32>
      %28 = arith.addf %25, %27 : vector<8x128xf32>
      %c0_22 = arith.constant 0 : index
      %c0_23 = arith.constant 0 : index
      %29 = vector.load %arg7[%c0_22, %c0_23] : memref<8x128xf32, #tpu.memory_space<vmem>>, vector<8x128xf32>
      tpu.vector_store %arg7[%c0_22, %c0_23], %28 {strides = array<i32>} : memref<8x128xf32, #tpu.memory_space<vmem>>, vector<8x128xf32>,
    } else {
    }
    return
  }
  func.func @transform_0(%arg0: i32, %arg1: i32) -> (i32, i32) {
    %c0_i32 = arith.constant 0 : i32
    %c0_i32_0 = arith.constant 0 : i32
    return %arg0, %c0_i32 : i32, i32
  }
  func.func @transform_1(%arg0: i32, %arg1: i32) -> (i32, i32) {
    %c0_i32 = arith.constant 0 : i32
    %c0_i32_0 = arith.constant 0 : i32
    %c0_i32_1 = arith.constant 0 : i32
    return %c0_i32, %c0_i32_0 : i32, i32
  }
  func.func @transform_2(%arg0: i32, %arg1: i32) -> (i32, i32) {
    %c0_i32 = arith.constant 0 : i32
    %c0_i32_0 = arith.constant 0 : i32
    %c0_i32_1 = arith.constant 0 : i32
    return %c0_i32, %c0_i32_0 : i32, i32
  }
  func.func @transform_3(%arg0: i32, %arg1: i32) -> (i32, i32) {
    %c0_i32 = arith.constant 0 : i32
    %c0_i32_0 = arith.constant 0 : i32
    %c0_i32_1 = arith.constant 0 : i32
    return %c0_i32, %c0_i32_0 : i32, i32
  }
  func.func @transform_4(%arg0: i32, %arg1: i32) -> (i32, i32) {
    %c0_i32 = arith.constant 0 : i32
    %c0_i32_0 = arith.constant 0 : i32
    %c0_i32_1 = arith.constant 0 : i32
    return %c0_i32, %c0_i32_0 : i32, i32
  }
  func.func @transform_5(%arg0: i32, %arg1: i32) -> (i32, i32) {
    %c0_i32 = arith.constant 0 : i32
    %c0_i32_0 = arith.constant 0 : i32
    return %arg0, %c0_i32 : i32, i32
  }
}

</mosaic_0001>

<llo_original>
// kernel: tpu_custom_call.1
$region0: #{tpu_custom_call.1}
  #allocation0 [shape = 'u32[]', space=smem, size = 0x4, offset = 0x4, fixed_abs, tag = 'smem constant byte address 0x4 - core index']
  #allocation1 [shape = 'u32[144,128]{1,0:T(1,128)}', space=vmem, size = 0x12000, scoped, tag = 'internal scratch']
  #allocation2 [shape = 'f32[8,128]{1,0:T(8,128)}', space=vmem, size = 0x1000, scoped, tag = 'scratch operand']
  %s0 = inlined_call_operand.hbm [shape: f32[16,128], index: 0, kind: input, shape index: {}]
  %s1 = inlined_call_operand.hbm [shape: f32[128,128], index: 1, kind: input, shape index: {}]
  %s2 = inlined_call_operand.vmem [shape: f32[1,128], index: 2, kind: input, shape index: {}]
  %s3 = inlined_call_operand.hbm [shape: f32[128,128], index: 3, kind: input, shape index: {}]
  %s4 = inlined_call_operand.vmem [shape: f32[1,128], index: 4, kind: input, shape index: {}]
  %s5 = inlined_call_operand.hbm [shape: f32[16,128], index: 5, kind: output, shape index: {}]
  %s6 = sld [smem:[#allocation0]]
  $region73: #{tpu_custom_call.1} parent=0
    _
  %s8 = ssub.s32 1, %s6
  %s9 = scalar_select 0, %s8, %s6
  $region1: #{tpu_custom_call.1} parent=0
    #allocation3 [shape = 'u8[8192]{0}', space=vmem, size = 0x2000, scoped, tag = 'input window, operand 0']
    #allocation4 [shape = 's32[2]{0}', space=sflag, size = 0x8, scoped, tag = 'scoped memory for tpu_custom_call.1']
    #allocation5 [shape = 's32[2]{0}', space=sflag, size = 0x8, scoped, tag = 'scoped memory for tpu_custom_call.1']
    #allocation6 [shape = 'u8[65536]{0}', space=vmem, size = 0x10000, scoped, tag = 'input window, operand 1, single buffered']
    #allocation7 [shape = 's32[1]{0}', space=sflag, size = 0x4, scoped, tag = 'scoped memory for tpu_custom_call.1']
    #allocation8 [shape = 'u8[65536]{0}', space=vmem, size = 0x10000, scoped, tag = 'input window, operand 3, single buffered']
    #allocation9 [shape = 'u8[8192]{0}', space=vmem, size = 0x2000, scoped, tag = 'output window, operand 0']
    %10 = vsyncpa [#allocation4], 0
    %s11 = scalar_lea.sflag [#allocation4], 1
    %12 = vsyncpa %s11, 0
    %13 = vsyncpa [#allocation7], 0
    %14 = vsyncpa [#allocation5], 0
    %s15 = scalar_lea.sflag [#allocation5], 1
    %16 = vsyncpa %s15, 0
    loop: start=0, step=1, limit=4
    $region2: #{tpu_custom_call.1} parent=1 // loop_pre_header
      _
    $region3: #{tpu_custom_call.1} parent=1 // loop_header
      %s18 = sphi 0, %s22
      %p19 = scmp.ge.s32.totalorder %s18, 4
      %s25 = sphi 0, %s37
      %s26 = sphi 0, %s33
      %s27 = sphi 0, %s25
      %s28 = sphi 0, %s26
      %s29 = sphi 0, %s27
      %s30 = sphi 0, %s28
      %s40 = sphi 0, %s42
      %s43 = sphi 0, %s40
      %s44 = sphi 0, %s43
      %s60 = sphi 0, %s44
      %s64 = sphi 0, %s64
      %s66 = sphi 0, %s64
      %s67 = sphi 0, %s66
      %s81 = sphi 0, %s67
      %s85 = sphi 0, %s85
      %s87 = sphi 0, %s85
      %s88 = sphi 0, %s87
      %s102 = sphi 0, %s88
      %s106 = sphi 0, %s106
      %s108 = sphi 0, %s106
      %s109 = sphi 0, %s108
      %s123 = sphi 0, %s109
      %s127 = sphi 0, %s127
      %s129 = sphi 0, %s127
      %s130 = sphi 0, %s129
      %s144 = sphi 0, %s130
      %s150 = sphi 0, %s152
      %s153 = sphi 0, %s150
      %s154 = sphi 0, %s153
      %s170 = sphi 0, %s154
    $region4: #{tpu_custom_call.1} parent=1 // loop_header_branch
      %21 = sbr.rel (%p19) target = $region8
    $region5: #{tpu_custom_call.1} parent=1 // loop_body
      %s23 = ssub.s32 %s18, 1
      %s24 = ssub.s32 %s18, 2
      %s31 = sadd.s32 1, %s26
      %p32 = scmp.ge.s32.totalorder %s31, 1
      %s33 = scalar_select %p32, 0, %s31
      %s34 = sadd.s32 1, %s25
      %s35 = scalar_select %p32, %s34, %s25
      %p36 = scmp.ge.s32.totalorder %s35, 2
      %s37 = scalar_select %p36, 0, %s35
      %s38 = ssub.s32 %s25, %s37
      %p39 = scmp.eq.s32.totalorder %s38, 0
      %s41 = sadd.s32 %s40, 1
      %s42 = scalar_select %p39, %s40, %s41
      %p45 = pneg %p39
      %p46 = scmp.eq.s32.totalorder %s18, 1
      %p47 = por %p45, %p46
      %p48 = scmp.ne.s32.totalorder %s40, %s43
      %p49 = scmp.eq.s32.totalorder %s18, 0
      %p50 = por %p48, %p49
      %p51 = scmp.ne.s32.totalorder %s40, %s43
      %p52 = scmp.eq.s32.totalorder %s23, 1
      %p53 = por %p51, %p52
      %p54 = scmp.ne.s32.totalorder %s43, %s44
      %p55 = scmp.eq.s32.totalorder %s23, 0
      %p56 = por %p54, %p55
      %p57 = scmp.ne.s32.totalorder %s43, %s44
      %p58 = scmp.eq.s32.totalorder %s24, 1
      %p59 = por %p57, %p58
      %p61 = scmp.ne.s32.totalorder %s44, %s60
      %p62 = scmp.eq.s32.totalorder %s24, 0
      %p63 = por %p61, %p62
      %s65 = sadd.s32 %s64, 1
      %p68 = scmp.eq.s32.totalorder %s18, 1
      %p69 = scmp.ne.s32.totalorder %s64, %s66
      %p70 = scmp.eq.s32.totalorder %s18, 0
      %p71 = por %p69, %p70
      %p72 = scmp.ne.s32.totalorder %s64, %s66
      %p73 = scmp.eq.s32.totalorder %s23, 1
      %p74 = por %p72, %p73
      %p75 = scmp.ne.s32.totalorder %s66, %s67
      %p76 = scmp.eq.s32.totalorder %s23, 0
      %p77 = por %p75, %p76
      %p78 = scmp.ne.s32.totalorder %s66, %s67
      %p79 = scmp.eq.s32.totalorder %s24, 1
      %p80 = por %p78, %p79
      %p82 = scmp.ne.s32.totalorder %s67, %s81
      %p83 = scmp.eq.s32.totalorder %s24, 0
      %p84 = por %p82, %p83
      %s86 = sadd.s32 %s85, 1
      %p89 = scmp.eq.s32.totalorder %s18, 1
      %p90 = scmp.ne.s32.totalorder %s85, %s87
      %p91 = scmp.eq.s32.totalorder %s18, 0
      %p92 = por %p90, %p91
      %p93 = scmp.ne.s32.totalorder %s85, %s87
      %p94 = scmp.eq.s32.totalorder %s23, 1
      %p95 = por %p93, %p94
      %p96 = scmp.ne.s32.totalorder %s87, %s88
      %p97 = scmp.eq.s32.totalorder %s23, 0
      %p98 = por %p96, %p97
      %p99 = scmp.ne.s32.totalorder %s87, %s88
      %p100 = scmp.eq.s32.totalorder %s24, 1
      %p101 = por %p99, %p100
      %p103 = scmp.ne.s32.totalorder %s88, %s102
      %p104 = scmp.eq.s32.totalorder %s24, 0
      %p105 = por %p103, %p104
      %s107 = sadd.s32 %s106, 1
      %p110 = scmp.eq.s32.totalorder %s18, 1
      %p111 = scmp.ne.s32.totalorder %s106, %s108
      %p112 = scmp.eq.s32.totalorder %s18, 0
      %p113 = por %p111, %p112
      %p114 = scmp.ne.s32.totalorder %s106, %s108
      %p115 = scmp.eq.s32.totalorder %s23, 1
      %p116 = por %p114, %p115
      %p117 = scmp.ne.s32.totalorder %s108, %s109
      %p118 = scmp.eq.s32.totalorder %s23, 0
      %p119 = por %p117, %p118
      %p120 = scmp.ne.s32.totalorder %s108, %s109
      %p121 = scmp.eq.s32.totalorder %s24, 1
      %p122 = por %p120, %p121
      %p124 = scmp.ne.s32.totalorder %s109, %s123
      %p125 = scmp.eq.s32.totalorder %s24, 0
      %p126 = por %p124, %p125
      %s128 = sadd.s32 %s127, 1
      %p131 = scmp.eq.s32.totalorder %s18, 1
      %p132 = scmp.ne.s32.totalorder %s127, %s129
      %p133 = scmp.eq.s32.totalorder %s18, 0
      %p134 = por %p132, %p133
      %p135 = scmp.ne.s32.totalorder %s127, %s129
      %p136 = scmp.eq.s32.totalorder %s23, 1
      %p137 = por %p135, %p136
      %p138 = scmp.ne.s32.totalorder %s129, %s130
      %p139 = scmp.eq.s32.totalorder %s23, 0
      %p140 = por %p138, %p139
      %p141 = scmp.ne.s32.totalorder %s129, %s130
      %p142 = scmp.eq.s32.totalorder %s24, 1
      %p143 = por %p141, %p142
      %p145 = scmp.ne.s32.totalorder %s130, %s144
      %p146 = scmp.eq.s32.totalorder %s24, 0
      %p147 = por %p145, %p146
      %s148 = ssub.s32 %s25, %s37
      %p149 = scmp.eq.s32.totalorder %s148, 0
      %s151 = sadd.s32 %s150, 1
      %s152 = scalar_select %p149, %s150, %s151
      %p155 = pneg %p149
      %p156 = scmp.eq.s32.totalorder %s18, 1
      %p157 = por %p155, %p156
      %p158 = scmp.ne.s32.totalorder %s150, %s153
      %p159 = scmp.eq.s32.totalorder %s18, 0
      %p160 = por %p158, %p159
      %p161 = scmp.ne.s32.totalorder %s150, %s153
      %p162 = scmp.eq.s32.totalorder %s23, 1
      %p163 = por %p161, %p162
      %p164 = scmp.ne.s32.totalorder %s153, %s154
      %p165 = scmp.eq.s32.totalorder %s23, 0
      %p166 = por %p164, %p165
      %p167 = scmp.ne.s32.totalorder %s153, %s154
      %p168 = scmp.eq.s32.totalorder %s24, 1
      %p169 = por %p167, %p168
      %p171 = scmp.ne.s32.totalorder %s154, %s170
      %p172 = scmp.eq.s32.totalorder %s24, 0
      %p173 = por %p171, %p172
      %p174 = scmp.le.s32.totalorder 1, %s18
      %p175 = scmp.lt.s32.totalorder %s18, 3
      %p176 = pnand %p174, %p175
      %p177 = pneg %p176
      // Predicated region
      $region9: #{tpu_custom_call.1} parent=5 // pred_check
        _
      $region10: #{tpu_custom_call.1} parent=5 // pred_check_branch
        %179 = sbr.rel (%p176) target = $region12
      $region11: #{tpu_custom_call.1} parent=5 // pred_region
        %s180 = ssub.s32 %s18, 1
        // Predicated region
        $region13: #{tpu_custom_call.1} parent=11 // pred_check
          %p181 = pneg %p77
        $region14: #{tpu_custom_call.1} parent=11 // pred_check_branch
          %183 = sbr.rel (%p181) target = $region16
        $region15: #{tpu_custom_call.1} parent=11 // pred_region
          %s185 = ssub.s32 2048, 2048
          %186 = vsyncadd [#allocation7], %s185
          %s187 = sshll.u32 [#allocation6], 4
          %s188 = int_to_ptr.vmem [resolvable:$true] %s187
          %193 = dma.hbm_to_vmem [thread:$0]  %s1, 2048, %s188, [#allocation7], 128, 128, 8
        $region16: #{tpu_custom_call.1} parent=11 // pred_fallthru
          _
        // Predicated region
        $region17: #{tpu_custom_call.1} parent=11 // pred_check
          %p194 = pneg %p98
        $region18: #{tpu_custom_call.1} parent=11 // pred_check_branch
          %196 = sbr.rel (%p194) target = $region20
        $region19: #{tpu_custom_call.1} parent=11 // pred_region
          _
        $region20: #{tpu_custom_call.1} parent=11 // pred_fallthru
          _
        // Predicated region
        $region21: #{tpu_custom_call.1} parent=11 // pred_check
          %p197 = pneg %p119
        $region22: #{tpu_custom_call.1} parent=11 // pred_check_branch
          %199 = sbr.rel (%p197) target = $region24
        $region23: #{tpu_custom_call.1} parent=11 // pred_region
          %s201 = ssub.s32 2048, 2048
          %202 = vsyncadd [#allocation7], %s201
          %s203 = sshll.u32 [#allocation8], 4
          %s204 = int_to_ptr.vmem [resolvable:$true] %s203
          %209 = dma.hbm_to_vmem [thread:$0]  %s3, 2048, %s204, [#allocation7], 128, 128, 8
        $region24: #{tpu_custom_call.1} parent=11 // pred_fallthru
          _
        // Predicated region
        $region25: #{tpu_custom_call.1} parent=11 // pred_check
          %p210 = pneg %p140
        $region26: #{tpu_custom_call.1} parent=11 // pred_check_branch
          %212 = sbr.rel (%p210) target = $region28
        $region27: #{tpu_custom_call.1} parent=11 // pred_region
          _
        $region28: #{tpu_custom_call.1} parent=11 // pred_fallthru
          _
      $region12: #{tpu_custom_call.1} parent=5 // pred_fallthru
        _
      %p213 = scmp.lt.s32.totalorder %s18, 2
      // Predicated region
      $region29: #{tpu_custom_call.1} parent=5 // pred_check
        %p214 = pneg %p213
      $region30: #{tpu_custom_call.1} parent=5 // pred_check_branch
        %216 = sbr.rel (%p214) target = $region32
      $region31: #{tpu_custom_call.1} parent=5 // pred_region
        // Predicated region
        $region33: #{tpu_custom_call.1} parent=31 // pred_check
          %p217 = pneg %p50
        $region34: #{tpu_custom_call.1} parent=31 // pred_check_branch
          %219 = sbr.rel (%p217) target = $region36
        $region35: #{tpu_custom_call.1} parent=31 // pred_region
          %s220 = sand.u32 %s40, 1
          %s221 = scalar_lea.sflag [#allocation4], %s220
          %s222 = sand.u32 %s40, 1
          %s223 = smul.addr %s222, 8
          %s224 = scalar_lea.vmem [#allocation3], %s223
          %s226 = ssub.s32 128, 128
          %227 = vsyncadd %s221, %s226
          %s228 = smul.addr %s25, 128
          %s229 = scalar_lea.hbm %s0, %s228
          %s231 = sshll.u32 %s224, 4
          %s232 = int_to_ptr.vmem [resolvable:$true] %s231
          %234 = dma.hbm_to_vmem [thread:$0]  %s229, 128, %s232, %s221
        $region36: #{tpu_custom_call.1} parent=31 // pred_fallthru
          _
      $region32: #{tpu_custom_call.1} parent=5 // pred_fallthru
        _
      %p235 = scmp.le.s32.totalorder 1, %s18
      %p236 = scmp.lt.s32.totalorder %s18, 3
      %p237 = pnand %p235, %p236
      %p238 = pneg %p237
      // Predicated region
      $region37: #{tpu_custom_call.1} parent=5 // pred_check
        _
      $region38: #{tpu_custom_call.1} parent=5 // pred_check_branch
        %240 = sbr.rel (%p237) target = $region40
      $region39: #{tpu_custom_call.1} parent=5 // pred_region
        %s241 = ssub.s32 %s18, 1
        %s242 = sand.u32 %s43, 1
        %s243 = scalar_lea.sflag [#allocation4], %s242
        %s244 = sand.u32 %s43, 1
        %s245 = smul.addr %s244, 8
        %s246 = scalar_lea.vmem [#allocation3], %s245
        // Predicated region
        $region41: #{tpu_custom_call.1} parent=39 // pred_check
          %p247 = pneg %p56
        $region42: #{tpu_custom_call.1} parent=39 // pred_check_branch
          %249 = sbr.rel (%p247) target = $region44
        $region43: #{tpu_custom_call.1} parent=39 // pred_region
          %250 = dma.done %s243, 128
        $region44: #{tpu_custom_call.1} parent=39 // pred_fallthru
          _
        // Predicated region
        $region45: #{tpu_custom_call.1} parent=39 // pred_check
          %p251 = pneg %p77
        $region46: #{tpu_custom_call.1} parent=39 // pred_check_branch
          %253 = sbr.rel (%p251) target = $region48
        $region47: #{tpu_custom_call.1} parent=39 // pred_region
          %254 = dma.done [#allocation7], 2048
        $region48: #{tpu_custom_call.1} parent=39 // pred_fallthru
          _
        // Predicated region
        $region49: #{tpu_custom_call.1} parent=39 // pred_check
          %p255 = pneg %p119
        $region50: #{tpu_custom_call.1} parent=39 // pred_check_branch
          %257 = sbr.rel (%p255) target = $region52
        $region51: #{tpu_custom_call.1} parent=39 // pred_region
          %258 = dma.done [#allocation7], 2048
        $region52: #{tpu_custom_call.1} parent=39 // pred_fallthru
          _
        %s259 = sand.u32 %s43, 1
        %s260 = scalar_lea.sflag [#allocation4], %s259
        %s261 = sand.u32 %s43, 1
        %s262 = smul.addr %s261, 8
        %s263 = scalar_lea.vmem [#allocation3], %s262
        %p264 = pneg %p56
        %p265 = pneg %p53
        %p266 = pneg %p77
        %p267 = pneg %p74
        %p268 = pneg %p98
        %p269 = pneg %p95
        %p270 = pneg %p119
        %p271 = pneg %p116
        %p272 = pneg %p140
        %p273 = pneg %p137
        %p274 = pneg %p166
        %p275 = pneg %p163
        %s276 = sand.u32 %s153, 1
        %s277 = scalar_lea.sflag [#allocation5], %s276
        %s278 = sand.u32 %s153, 1
        %s279 = smul.addr %s278, 8
        %s280 = scalar_lea.vmem [#allocation9], %s279
        %p281 = scmp.eq.s32.totalorder %s28, 0
        // Predicated region
        $region53: #{tpu_custom_call.1} parent=39 // pred_check
          %p282 = pneg %p281
        $region54: #{tpu_custom_call.1} parent=39 // pred_check_branch
          %284 = sbr.rel (%p282) target = $region56
        $region55: #{tpu_custom_call.1} parent=39 // pred_region
          %285 = vst [vmem:[#allocation2] sm:$0xff] 0.0
        $region56: #{tpu_custom_call.1} parent=39 // pred_fallthru
          _
        %v286 = vld [vmem:[%s246] sm:$0xff]
        %v287 = vld [vmem:[#allocation6] sm:$0xff]
        %v288 = vld [vmem:[#allocation6 + $0x8] sm:$0xff]
        %v289 = vld [vmem:[#allocation6 + $0x10] sm:$0xff]
        %v290 = vld [vmem:[#allocation6 + $0x18] sm:$0xff]
        %v291 = vld [vmem:[#allocation6 + $0x20] sm:$0xff]
        %v292 = vld [vmem:[#allocation6 + $0x28] sm:$0xff]
        %v293 = vld [vmem:[#allocation6 + $0x30] sm:$0xff]
        %v294 = vld [vmem:[#allocation6 + $0x38] sm:$0xff]
        %v295 = vld [vmem:[#allocation6 + $0x40] sm:$0xff]
        %v296 = vld [vmem:[#allocation6 + $0x48] sm:$0xff]
        %v297 = vld [vmem:[#allocation6 + $0x50] sm:$0xff]
        %v298 = vld [vmem:[#allocation6 + $0x58] sm:$0xff]
        %v299 = vld [vmem:[#allocation6 + $0x60] sm:$0xff]
        %v300 = vld [vmem:[#allocation6 + $0x68] sm:$0xff]
        %v301 = vld [vmem:[#allocation6 + $0x70] sm:$0xff]
        %v302 = vld [vmem:[#allocation6 + $0x78] sm:$0xff]
        %v303 = vld [vmem:[%s2] sm:$0x1]
        %v305 = vlaneseq
        %v306 = vshrl.u32 %v305, 7
        %v307 = vsub.s32 0, %v306
        %v308 = vrot.slane %v303, %v307
        %310 = vmatprep.subr.mxu0 0.0
        %311 = vmatpush1.msra.mxu0 %v287
        %312 = vmatprep.subr.mxu0 0.0
        %313 = vmatpush1.msra.mxu0 %v288
        %314 = vmatprep.subr.mxu0 0.0
        %315 = vmatpush1.msra.mxu0 %v289
        %316 = vmatprep.subr.mxu0 0.0
        %317 = vmatpush1.msra.mxu0 %v290
        %318 = vmatprep.subr.mxu0 0.0
        %319 = vmatpush1.msra.mxu0 %v291
        %320 = vmatprep.subr.mxu0 0.0
        %321 = vmatpush1.msra.mxu0 %v292
        %322 = vmatprep.subr.mxu0 0.0
        %323 = vmatpush1.msra.mxu0 %v293
        %324 = vmatprep.subr.mxu0 0.0
        %325 = vmatpush1.msra.mxu0 %v294
        %326 = vmatprep.subr.mxu0 0.0
        %327 = vmatpush1.msra.mxu0 %v295
        %328 = vmatprep.subr.mxu0 0.0
        %329 = vmatpush1.msra.mxu0 %v296
        %330 = vmatprep.subr.mxu0 0.0
        %331 = vmatpush1.msra.mxu0 %v297
        %332 = vmatprep.subr.mxu0 0.0
        %333 = vmatpush1.msra.mxu0 %v298
        %334 = vmatprep.subr.mxu0 0.0
        %335 = vmatpush1.msra.mxu0 %v299
        %336 = vmatprep.subr.mxu0 0.0
        %337 = vmatpush1.msra.mxu0 %v300
        %338 = vmatprep.subr.mxu0 0.0
        %339 = vmatpush1.msra.mxu0 %v301
        %340 = vmatprep.subr.mxu0 0.0
        %341 = vmatpush1.msra.mxu0 %v302
        %342 = vmatprep.subr.mxu0 0.0
        %343 = vmatpush1.msra.mxu0 0.0
        %344 = vmatprep.subr.mxu0 0.0
        %345 = vmatpush1.msra.mxu0 0.0
        %346 = vmatprep.subr.mxu0 0.0
        %347 = vmatpush1.msra.mxu0 0.0
        %348 = vmatprep.subr.mxu0 0.0
        %349 = vmatpush1.msra.mxu0 0.0
        %350 = vmatprep.subr.mxu0 0.0
        %351 = vmatpush1.msra.mxu0 0.0
        %352 = vmatprep.subr.mxu0 0.0
        %353 = vmatpush1.msra.mxu0 0.0
        %354 = vmatprep.subr.mxu0 0.0
        %355 = vmatpush1.msra.mxu0 0.0
        %356 = vmatprep.subr.mxu0 0.0
        %357 = vmatpush1.msra.mxu0 0.0
        %358 = vmatprep.subr.mxu0 0.0
        %359 = vmatpush1.msra.mxu0 0.0
        %360 = vmatprep.subr.mxu0 0.0
        %361 = vmatpush1.msra.mxu0 0.0
        %362 = vmatprep.subr.mxu0 0.0
        %363 = vmatpush1.msra.mxu0 0.0
        %364 = vmatprep.subr.mxu0 0.0
        %365 = vmatpush1.msra.mxu0 0.0
        %366 = vmatprep.subr.mxu0 0.0
        %367 = vmatpush1.msra.mxu0 0.0
        %368 = vmatprep.subr.mxu0 0.0
        %369 = vmatpush1.msra.mxu0 0.0
        %370 = vmatprep.subr.mxu0 0.0
        %371 = vmatpush1.msra.mxu0 0.0
        %372 = vmatprep.subr.mxu0 0.0
        %373 = vmatpush1.msra.mxu0 0.0
        %374 = vmatprep.mubr.f32.mxu0 0.0
        %375 = vmatmul.mubr.f32.gmra.mrb[0].mxu0 %v286
        %v376 = vpop.f32.mrb[0].mxu0
        %v377 = vadd.f32 %v308, %v376
        %v378 = vpop.f32.mrb[0].mxu0
        %379 = vdwg.mxu0
        %v380 = vmul.f32 %v377, 0.5
        %v381 = vmul.f32 %v377, 0.70710677
        %v382 = verf.f32.pop %v381
        %v383 = vadd.f32 %v382, 1.0
        %v384 = vmul.f32 %v380, %v383
        %v385 = vld [vmem:[#allocation2] sm:$0xff]
        %v386 = vld [vmem:[#allocation8] sm:$0xff]
        %v387 = vld [vmem:[#allocation8 + $0x8] sm:$0xff]
        %v388 = vld [vmem:[#allocation8 + $0x10] sm:$0xff]
        %v389 = vld [vmem:[#allocation8 + $0x18] sm:$0xff]
        %v390 = vld [vmem:[#allocation8 + $0x20] sm:$0xff]
        %v391 = vld [vmem:[#allocation8 + $0x28] sm:$0xff]
        %v392 = vld [vmem:[#allocation8 + $0x30] sm:$0xff]
        %v393 = vld [vmem:[#allocation8 + $0x38] sm:$0xff]
        %v394 = vld [vmem:[#allocation8 + $0x40] sm:$0xff]
        %v395 = vld [vmem:[#allocation8 + $0x48] sm:$0xff]
        %v396 = vld [vmem:[#allocation8 + $0x50] sm:$0xff]
        %v397 = vld [vmem:[#allocation8 + $0x58] sm:$0xff]
        %v398 = vld [vmem:[#allocation8 + $0x60] sm:$0xff]
        %v399 = vld [vmem:[#allocation8 + $0x68] sm:$0xff]
        %v400 = vld [vmem:[#allocation8 + $0x70] sm:$0xff]
        %v401 = vld [vmem:[#allocation8 + $0x78] sm:$0xff]
        %402 = vmatprep.subr.mxu0 0.0
        %403 = vmatpush1.msra.mxu0 %v386
        %404 = vmatprep.subr.mxu0 0.0
        %405 = vmatpush1.msra.mxu0 %v387
        %406 = vmatprep.subr.mxu0 0.0
        %407 = vmatpush1.msra.mxu0 %v388
        %408 = vmatprep.subr.mxu0 0.0
        %409 = vmatpush1.msra.mxu0 %v389
        %410 = vmatprep.subr.mxu0 0.0
        %411 = vmatpush1.msra.mxu0 %v390
        %412 = vmatprep.subr.mxu0 0.0
        %413 = vmatpush1.msra.mxu0 %v391
        %414 = vmatprep.subr.mxu0 0.0
        %415 = vmatpush1.msra.mxu0 %v392
        %416 = vmatprep.subr.mxu0 0.0
        %417 = vmatpush1.msra.mxu0 %v393
        %418 = vmatprep.subr.mxu0 0.0
        %419 = vmatpush1.msra.mxu0 %v394
        %420 = vmatprep.subr.mxu0 0.0
        %421 = vmatpush1.msra.mxu0 %v395
        %422 = vmatprep.subr.mxu0 0.0
        %423 = vmatpush1.msra.mxu0 %v396
        %424 = vmatprep.subr.mxu0 0.0
        %425 = vmatpush1.msra.mxu0 %v397
        %426 = vmatprep.subr.mxu0 0.0
        %427 = vmatpush1.msra.mxu0 %v398
        %428 = vmatprep.subr.mxu0 0.0
        %429 = vmatpush1.msra.mxu0 %v399
        %430 = vmatprep.subr.mxu0 0.0
        %431 = vmatpush1.msra.mxu0 %v400
        %432 = vmatprep.subr.mxu0 0.0
        %433 = vmatpush1.msra.mxu0 %v401
        %434 = vmatprep.subr.mxu0 0.0
        %435 = vmatpush1.msra.mxu0 0.0
        %436 = vmatprep.subr.mxu0 0.0
        %437 = vmatpush1.msra.mxu0 0.0
        %438 = vmatprep.subr.mxu0 0.0
        %439 = vmatpush1.msra.mxu0 0.0
        %440 = vmatprep.subr.mxu0 0.0
        %441 = vmatpush1.msra.mxu0 0.0
        %442 = vmatprep.subr.mxu0 0.0
        %443 = vmatpush1.msra.mxu0 0.0
        %444 = vmatprep.subr.mxu0 0.0
        %445 = vmatpush1.msra.mxu0 0.0
        %446 = vmatprep.subr.mxu0 0.0
        %447 = vmatpush1.msra.mxu0 0.0
        %448 = vmatprep.subr.mxu0 0.0
        %449 = vmatpush1.msra.mxu0 0.0
        %450 = vmatprep.subr.mxu0 0.0
        %451 = vmatpush1.msra.mxu0 0.0
        %452 = vmatprep.subr.mxu0 0.0
        %453 = vmatpush1.msra.mxu0 0.0
        %454 = vmatprep.subr.mxu0 0.0
        %455 = vmatpush1.msra.mxu0 0.0
        %456 = vmatprep.subr.mxu0 0.0
        %457 = vmatpush1.msra.mxu0 0.0
        %458 = vmatprep.subr.mxu0 0.0
        %459 = vmatpush1.msra.mxu0 0.0
        %460 = vmatprep.subr.mxu0 0.0
        %461 = vmatpush1.msra.mxu0 0.0
        %462 = vmatprep.subr.mxu0 0.0
        %463 = vmatpush1.msra.mxu0 0.0
        %464 = vmatprep.subr.mxu0 0.0
        %465 = vmatpush1.msra.mxu0 0.0
        %466 = vmatprep.mubr.f32.mxu0 0.0
        %467 = vmatmul.mubr.f32.gmra.mrb[0].mxu0 %v384
        %v468 = vpop.f32.mrb[0].mxu0
        %v469 = vadd.f32 0.0, %v468
        %v470 = vpop.f32.mrb[0].mxu0
        %471 = vdwg.mxu0
        %v472 = vadd.f32 %v385, %v469
        %473 = vst [vmem:[#allocation2] sm:$0xff] %v472
        // Predicated region
        $region57: #{tpu_custom_call.1} parent=39 // pred_check
          %p474 = pneg %p281
        $region58: #{tpu_custom_call.1} parent=39 // pred_check_branch
          %476 = sbr.rel (%p474) target = $region60
        $region59: #{tpu_custom_call.1} parent=39 // pred_region
          %v477 = vld [vmem:[#allocation2] sm:$0xff]
          %v478 = vld [vmem:[%s4] sm:$0x1]
          %v480 = vlaneseq
          %v481 = vshrl.u32 %v480, 7
          %v482 = vsub.s32 0, %v481
          %v483 = vrot.slane %v478, %v482
          %v485 = vadd.f32 %v477, %v483
          %486 = vst [vmem:[%s280] sm:$0xff] %v485
        $region60: #{tpu_custom_call.1} parent=39 // pred_fallthru
          _
        %s487 = sand.u32 %s153, 1
        %s488 = scalar_lea.sflag [#allocation5], %s487
        %s489 = sand.u32 %s153, 1
        %s490 = smul.addr %s489, 8
        %s491 = scalar_lea.vmem [#allocation9], %s490
        // Predicated region
        $region61: #{tpu_custom_call.1} parent=39 // pred_check
          %p492 = pneg %p163
        $region62: #{tpu_custom_call.1} parent=39 // pred_check_branch
          %494 = sbr.rel (%p492) target = $region64
        $region63: #{tpu_custom_call.1} parent=39 // pred_region
          %s496 = ssub.s32 128, 128
          %497 = vsyncadd %s488, %s496
          %s498 = smul.addr %s27, 128
          %s499 = scalar_lea.hbm %s5, %s498
          %s501 = sshll.u32 %s491, 4
          %s502 = int_to_ptr.vmem [resolvable:$true] %s501
          %504 = dma.vmem_to_hbm [thread:$0]  %s502, 128, %s499, %s488
        $region64: #{tpu_custom_call.1} parent=39 // pred_fallthru
          _
      $region40: #{tpu_custom_call.1} parent=5 // pred_fallthru
        _
      %p505 = scmp.le.s32.totalorder 2, %s18
      // Predicated region
      $region65: #{tpu_custom_call.1} parent=5 // pred_check
        %p506 = pneg %p505
      $region66: #{tpu_custom_call.1} parent=5 // pred_check_branch
        %508 = sbr.rel (%p506) target = $region68
      $region67: #{tpu_custom_call.1} parent=5 // pred_region
        %s509 = ssub.s32 %s18, 2
        // Predicated region
        $region69: #{tpu_custom_call.1} parent=67 // pred_check
          %p510 = pneg %p169
        $region70: #{tpu_custom_call.1} parent=67 // pred_check_branch
          %512 = sbr.rel (%p510) target = $region72
        $region71: #{tpu_custom_call.1} parent=67 // pred_region
          %s513 = sand.u32 %s154, 1
          %s514 = scalar_lea.sflag [#allocation5], %s513
          %s515 = sand.u32 %s154, 1
          %s516 = smul.addr %s515, 8
          %s517 = scalar_lea.vmem [#allocation9], %s516
          %518 = dma.done %s514, 128
        $region72: #{tpu_custom_call.1} parent=67 // pred_fallthru
          _
      $region68: #{tpu_custom_call.1} parent=5 // pred_fallthru
        _
    $region6: #{tpu_custom_call.1} parent=1 // loop_footer
      %s22 = sadd.s32 1, %s18
    $region7: #{tpu_custom_call.1} parent=1 // loop_footer_branch
      %17 = sbr.rel target = $region3
    $region8: #{tpu_custom_call.1} parent=1 // loop_exit
      _
    %519 = vsyncpa [#allocation4], 1
    %s520 = scalar_lea.sflag [#allocation4], 1
    %521 = vsyncpa %s520, 1
    %522 = vsyncpa [#allocation7], 1
    %523 = vsyncpa [#allocation5], 1
    %s524 = scalar_lea.sflag [#allocation5], 1
    %525 = vsyncpa %s524, 1

</llo_original>
